<compile_context>
chip_gen: v7x
topology: tpu7x:2x2x1
jax: 0.10.0
libtpu: 0.0.40
codegen_flags: <defaults>
</compile_context>

<pallas_src>
import functools

import jax
import jax.numpy as jnp
from jax.experimental import pallas as pl
from jax.experimental.pallas import tpu as pltpu

_LANE = 128
_VMEM_BUDGET = 40 * 1024 * 1024  # headroom vs v7x's 64 MiB physical VMEM


def _round_up(n, m):
    return ((n + m - 1) // m) * m


def _pad_axis(a, axis, mult):
    pad = (-a.shape[axis]) % mult
    if pad == 0:
        return a
    widths = [(0, 0)] * a.ndim
    widths[axis] = (0, pad)
    return jnp.pad(a, widths)


# ---------------------------------------------------------------------------
# Row-tiled linear:  o = x @ w + b   (bf16 MXU inputs, f32 accumulation)
# ---------------------------------------------------------------------------
def _linear_kernel(x_ref, w_ref, b_ref, o_ref):
    acc = jnp.dot(x_ref[...], w_ref[...], preferred_element_type=jnp.float32)
    # bias add + output cast fused into the epilogue (single f32 temporary)
    o_ref[...] = (acc + b_ref[...]).astype(o_ref.dtype)


def _linear_vmem_bytes(tm, kp, np_):
    # conservative f32 accounting: double-buffered x/out tiles, (potentially
    # double-buffered) resident weights + bias, one f32 accumulator tile.
    x_tile = tm * kp * 4
    o_tile = tm * np_ * 4
    w_res = kp * np_ * 4 + np_ * 4
    return 2 * (x_tile + o_tile) + 2 * w_res + tm * np_ * 4


def linear_pallas(x2, w, b, *, tm=256, mxu_dtype=jnp.bfloat16, out_dtype=None):
    """x2: (M, K); w: (K, Nout); b: (Nout,). Returns (M, Nout)."""
    M, K = x2.shape
    K2, Nout = w.shape
    assert K == K2
    out_dtype = x2.dtype if out_dtype is None else out_dtype

    # Lane-dense padding: feature dims -> multiples of 128 (avoids masked
    # vst.msk partial stores / underfilled vregs). Zero padding is exact.
    xp = _pad_axis(x2, 1, _LANE).astype(mxu_dtype)
    wp = _pad_axis(_pad_axis(w, 0, _LANE), 1, _LANE).astype(mxu_dtype)
    bp = _pad_axis(b.astype(jnp.float32).reshape(1, -1), 1, _LANE)
    Kp = xp.shape[1]
    Np = wp.shape[1]

    # Row tile: multiple of 16 (bf16 sublane packing), capped by the row count
    # (tiny inputs -> single block, no per-step grid overhead) and by VMEM.
    tm_eff = _round_up(min(tm, _round_up(M, 16)), 16)
    while tm_eff > 16 and _linear_vmem_bytes(tm_eff, Kp, Np) > _VMEM_BUDGET:
        tm_eff = _round_up(tm_eff // 2, 16)

    xp = _pad_axis(xp, 0, tm_eff)
    Mp = xp.shape[0]
    grid = (Mp // tm_eff,)

    est = _linear_vmem_bytes(tm_eff, Kp, Np)
    vmem_limit = None
    if est > 24 * 1024 * 1024:  # above default scoped-VMEM territory
        vmem_limit = min(64 * 1024 * 1024, int(est * 1.5))

    out = pl.pallas_call(
        _linear_kernel,
        out_shape=jax.ShapeDtypeStruct((Mp, Np), out_dtype),
        grid=grid,
        in_specs=[
            pl.BlockSpec((tm_eff, Kp), lambda i: (i, 0)),  # streamed row tile
            pl.BlockSpec((Kp, Np), lambda i: (0, 0)),      # resident weights
            pl.BlockSpec((1, Np), lambda i: (0, 0)),       # resident bias
        ],
        out_specs=pl.BlockSpec((tm_eff, Np), lambda i: (i, 0)),
        compiler_params=pltpu.CompilerParams(
            dimension_semantics=("parallel",),
            vmem_limit_bytes=vmem_limit,
        ),
    )(xp, wp, bp)
    return out[:M, :Nout]


# ---------------------------------------------------------------------------
# Fused per-(batch, head) attention core:  softmax(q k^T * scale) @ v
# ---------------------------------------------------------------------------
def _mha_kernel(q_ref, k_ref, v_ref, o_ref, *, scale, mxu_dtype):
    q = q_ref[...]                                   # (N, hd_pad)
    k = k_ref[...]
    # scores = q @ k^T (contract over head_dim), accumulated in f32 on the MXU
    s = jax.lax.dot_general(q, k, (((1,), (1,)), ((), ())),
                            preferred_element_type=jnp.float32)
    s = s * scale
    # numerically stable softmax over keys (f32, exp on the EUP slot)
    s = s - jnp.max(s, axis=-1, keepdims=True)
    p = jnp.exp(s)
    p = p / jnp.sum(p, axis=-1, keepdims=True)
    # TODO(synk): attn_drop with nonzero p would need pltpu.prng_seed /
    # prng_random_bits in-kernel; module default p=0.0 is identity.
    ctx = jnp.dot(p.astype(mxu_dtype), v_ref[...],
                  preferred_element_type=jnp.float32)
    o_ref[...] = ctx.astype(o_ref.dtype)


def mha_pallas(q, k, v, scale, *, mxu_dtype=jnp.bfloat16):
    """q, k, v: (B, H, N, hd) -> (B, H, N, hd) in f32."""
    B, H, N, hd = q.shape
    hdp = _round_up(hd, _LANE)  # lane-dense head_dim; zero padding is exact
    pad = [(0, 0), (0, 0), (0, 0), (0, hdp - hd)]
    qp = jnp.pad(q, pad).astype(mxu_dtype)
    kp = jnp.pad(k, pad).astype(mxu_dtype)
    vp = jnp.pad(v, pad).astype(mxu_dtype)

    kernel = functools.partial(_mha_kernel, scale=scale, mxu_dtype=mxu_dtype)
    spec = pl.BlockSpec((None, None, N, hdp), lambda b, h: (b, h, 0, 0))
    out = pl.pallas_call(
        kernel,
        out_shape=jax.ShapeDtypeStruct((B, H, N, hdp), jnp.float32),
        grid=(B, H),  # B*H parallel steps -> both TensorCores busy on v7x
        in_specs=[spec, spec, spec],
        out_specs=spec,
        compiler_params=pltpu.CompilerParams(
            dimension_semantics=("parallel", "parallel"),
        ),
    )(qp, kp, vp)
    return out[..., :hd]


# ---------------------------------------------------------------------------
# Full Attention forward
# ---------------------------------------------------------------------------
@functools.partial(jax.jit, static_argnames=("num_heads", "tm", "mxu_dtype"))
def attention_pallas(x, w_qkv, b_qkv, w_proj, b_proj, *, num_heads,
                     tm=256, mxu_dtype=jnp.bfloat16):
    """x: (B, N, C). Weights are pre-transposed nn.Linear weights:
    w_qkv: (C, 3C), b_qkv: (3C,), w_proj: (C, C), b_proj: (C,)."""
    B, N, C = x.shape
    assert C % num_heads == 0
    hd = C // num_heads
    scale = hd ** -0.5

    # qkv projection (f32 output keeps full precision going into softmax)
    x2 = x.reshape(B * N, C)
    qkv2 = linear_pallas(x2, w_qkv, b_qkv, tm=tm, mxu_dtype=mxu_dtype,
                         out_dtype=jnp.float32)                       # (B*N, 3C)

    # split heads: mirrors .reshape(B, N, 3, H, hd).permute(2, 0, 3, 1, 4)
    qkv = qkv2.reshape(B, N, 3, num_heads, hd).transpose(2, 0, 3, 1, 4)
    q, k, v = qkv[0], qkv[1], qkv[2]                                  # (B,H,N,hd)

    ctx = mha_pallas(q, k, v, scale, mxu_dtype=mxu_dtype)             # (B,H,N,hd)
    ctx2 = ctx.transpose(0, 2, 1, 3).reshape(B * N, C)

    out2 = linear_pallas(ctx2, w_proj, b_proj, tm=tm, mxu_dtype=mxu_dtype,
                         out_dtype=x.dtype)
    # TODO(synk): proj_drop (p=0.0 default) is identity.
    return out2.reshape(B, N, C)


# ---------------------------------------------------------------------------
# Pure-JAX reference (mirrors the PyTorch module)
# ---------------------------------------------------------------------------
def _reference_attention(x, w_qkv, b_qkv, w_proj, b_proj, num_heads):
    B, N, C = x.shape
    hd = C // num_heads
    scale = hd ** -0.5
    hp = jax.lax.Precision.HIGHEST
    qkv = jnp.einsum("bnc,cd->bnd", x, w_qkv, precision=hp) + b_qkv
    qkv = qkv.reshape(B, N, 3, num_heads, hd).transpose(2, 0, 3, 1, 4)
    q, k, v = qkv[0], qkv[1], qkv[2]
    attn = jnp.einsum("bhnd,bhmd->bhnm", q, k, precision=hp) * scale
    attn = jax.nn.softmax(attn, axis=-1)
    ctx = jnp.einsum("bhnm,bhmd->bhnd", attn, v, precision=hp)
    ctx = ctx.transpose(0, 2, 1, 3).reshape(B, N, C)
    return jnp.einsum("bnc,cd->bnd", ctx, w_proj, precision=hp) + b_proj


if __name__ == "__main__":
    # Small shapes consistent with the module: dim=64, num_heads=8 (head_dim=8).
    B, N = 2, 8
    dim, num_heads = 64, 8

    key = jax.random.PRNGKey(0)
    kx, k1, k2, k3 = jax.random.split(key, 4)

    x = jax.random.normal(kx, (B, N, dim), dtype=jnp.float32)
    # nn.Linear weights stored pre-transposed as (in, out); qkv_bias=False default.
    w_qkv = jax.random.normal(k1, (dim, 3 * dim), jnp.float32) * 0.05
    b_qkv = jnp.zeros((3 * dim,), jnp.float32)
    w_proj = jax.random.normal(k2, (dim, dim), jnp.float32) * 0.05
    b_proj = jax.random.normal(k3, (dim,), jnp.float32) * 0.05

    ref = _reference_attention(x, w_qkv, b_qkv, w_proj, b_proj, num_heads)

    # f32 MXU path: tight tolerance vs reference.
    out_f32 = attention_pallas(x, w_qkv, b_qkv, w_proj, b_proj,
                               num_heads=num_heads, mxu_dtype=jnp.float32)
    out_f32 = jax.block_until_ready(out_f32)
    assert out_f32.shape == (B, N, dim)
    assert jnp.allclose(out_f32, ref, atol=1e-4, rtol=1e-4), "f32 path mismatch"

    # bf16 MXU path (default: bf16 inputs, f32 accumulation): looser tolerance.
    out_bf16 = attention_pallas(x, w_qkv, b_qkv, w_proj, b_proj,
                                num_heads=num_heads, mxu_dtype=jnp.bfloat16)
    out_bf16 = jax.block_until_ready(out_bf16)
    assert out_bf16.shape == (B, N, dim)
    assert jnp.allclose(out_bf16, ref, atol=2e-2, rtol=2e-2), "bf16 path mismatch"

    print("KERNEL_OK")
</pallas_src>

<mosaic_0001>
module attributes {stable_mosaic.version = 11 : i64} {
  func.func @_linear_kernel(%arg0: i32, %arg1: memref<16x128xf32, #tpu.memory_space<vmem>>, %arg2: memref<128x256xf32, #tpu.memory_space<vmem>>, %arg3: memref<1x256xf32, #tpu.memory_space<vmem>>, %arg4: memref<16x256xf32, #tpu.memory_space<vmem>>) attributes {dimension_semantics = [#tpu.dimension_semantics<parallel>], iteration_bounds = array<i64: 1>, scalar_prefetch = 0 : i64, scratch_operands = 0 : i64, tpu.core_type = #tpu.core_type<tc>, window_params = [{transform_indices = @transform_0, window_bounds = array<i64: 16, 128>}, {pipeline_mode = #tpu.pipeline_mode<synchronous>, transform_indices = @transform_1, window_bounds = array<i64: 128, 256>}, {pipeline_mode = #tpu.pipeline_mode<synchronous>, transform_indices = @transform_2, window_bounds = array<i64: 1, 256>}, {transform_indices = @transform_3, window_bounds = array<i64: 16, 256>}]} {
    %c0 = arith.constant 0 : index
    %c0_0 = arith.constant 0 : index
    %0 = vector.load %arg1[%c0, %c0_0] : memref<16x128xf32, #tpu.memory_space<vmem>>, vector<16x128xf32>
    %c0_1 = arith.constant 0 : index
    %c0_2 = arith.constant 0 : index
    %1 = vector.load %arg2[%c0_1, %c0_2] : memref<128x256xf32, #tpu.memory_space<vmem>>, vector<128x256xf32>
    %cst = arith.constant dense<0.000000e+00> : vector<16x256xf32>
    %2 = tpu.matmul %0, %1, %cst {dimension_numbers = #tpu.dot_dimension_numbers<[1], [0], [0], [1], [0, 0, 1, 1], [], []>} : vector<16x128xf32>, vector<128x256xf32>, vector<16x256xf32> -> vector<16x256xf32>
    %c0_3 = arith.constant 0 : index
    %c0_4 = arith.constant 0 : index
    %3 = vector.load %arg3[%c0_3, %c0_4] : memref<1x256xf32, #tpu.memory_space<vmem>>, vector<1x256xf32>
    %4 = vector.broadcast %3 : vector<1x256xf32> to vector<16x256xf32>
    %5 = arith.addf %2, %4 : vector<16x256xf32>
    %c0_5 = arith.constant 0 : index
    %c0_6 = arith.constant 0 : index
    %6 = vector.load %arg4[%c0_5, %c0_6] : memref<16x256xf32, #tpu.memory_space<vmem>>, vector<16x256xf32>
    tpu.vector_store %arg4[%c0_5, %c0_6], %5 {strides = array<i32>} : memref<16x256xf32, #tpu.memory_space<vmem>>, vector<16x256xf32>,
    return
  }
  func.func @transform_0(%arg0: i32) -> (i32, i32) {
    %c0_i32 = arith.constant 0 : i32
    %c0_i32_0 = arith.constant 0 : i32
    return %arg0, %c0_i32 : i32, i32
  }
  func.func @transform_1(%arg0: i32) -> (i32, i32) {
    %c0_i32 = arith.constant 0 : i32
    %c0_i32_0 = arith.constant 0 : i32
    %c0_i32_1 = arith.constant 0 : i32
    return %c0_i32, %c0_i32_0 : i32, i32
  }
  func.func @transform_2(%arg0: i32) -> (i32, i32) {
    %c0_i32 = arith.constant 0 : i32
    %c0_i32_0 = arith.constant 0 : i32
    %c0_i32_1 = arith.constant 0 : i32
    return %c0_i32, %c0_i32_0 : i32, i32
  }
  func.func @transform_3(%arg0: i32) -> (i32, i32) {
    %c0_i32 = arith.constant 0 : i32
    %c0_i32_0 = arith.constant 0 : i32
    return %arg0, %c0_i32 : i32, i32
  }
}

module attributes {stable_mosaic.version = 11 : i64} {
  func.func @_mha_kernel(%arg0: i32, %arg1: i32, %arg2: memref<1x1x8x128xf32, #tpu.memory_space<vmem>>, %arg3: memref<1x1x8x128xf32, #tpu.memory_space<vmem>>, %arg4: memref<1x1x8x128xf32, #tpu.memory_space<vmem>>, %arg5: memref<1x1x8x128xf32, #tpu.memory_space<vmem>>) attributes {dimension_semantics = [#tpu.dimension_semantics<parallel>, #tpu.dimension_semantics<parallel>], iteration_bounds = array<i64: 2, 8>, scalar_prefetch = 0 : i64, scratch_operands = 0 : i64, tpu.core_type = #tpu.core_type<tc>, window_params = [{transform_indices = @transform_0, window_bounds = array<i64: 1, 1, 8, 128>}, {transform_indices = @transform_1, window_bounds = array<i64: 1, 1, 8, 128>}, {transform_indices = @transform_2, window_bounds = array<i64: 1, 1, 8, 128>}, {transform_indices = @transform_3, window_bounds = array<i64: 1, 1, 8, 128>}]} {
    %c0 = arith.constant 0 : index
    %c0_0 = arith.constant 0 : index
    %c0_1 = arith.constant 0 : index
    %c0_2 = arith.constant 0 : index
    %0 = vector.load %arg2[%c0, %c0_0, %c0_1, %c0_2] : memref<1x1x8x128xf32, #tpu.memory_space<vmem>>, vector<1x1x8x128xf32>
    %1 = vector.shape_cast %0 : vector<1x1x8x128xf32> to vector<8x128xf32>
    %c0_3 = arith.constant 0 : index
    %c0_4 = arith.constant 0 : index
    %c0_5 = arith.constant 0 : index
    %c0_6 = arith.constant 0 : index
    %2 = vector.load %arg3[%c0_3, %c0_4, %c0_5, %c0_6] : memref<1x1x8x128xf32, #tpu.memory_space<vmem>>, vector<1x1x8x128xf32>
    %3 = vector.shape_cast %2 : vector<1x1x8x128xf32> to vector<8x128xf32>
    %cst = arith.constant dense<0.000000e+00> : vector<8x8xf32>
    %4 = tpu.matmul %1, %3, %cst {dimension_numbers = #tpu.dot_dimension_numbers<[1], [1], [0], [0], [0, 0, 1, 0], [], []>} : vector<8x128xf32>, vector<8x128xf32>, vector<8x8xf32> -> vector<8x8xf32>
    %cst_7 = arith.constant 0.353553385 : f32
    %5 = vector.broadcast %cst_7 : f32 to vector<8x8xf32>
    %6 = arith.mulf %4, %5 : vector<8x8xf32>
    %cst_8 = arith.constant dense<0xFF800000> : vector<8xf32>
    %7 = vector.multi_reduction <maximumf>, %6, %cst_8 [1] : vector<8x8xf32> to vector<8xf32>
    %8 = vector.shape_cast %7 : vector<8xf32> to vector<8x1xf32>
    %9 = vector.broadcast %8 : vector<8x1xf32> to vector<8x8xf32>
    %10 = arith.subf %6, %9 : vector<8x8xf32>
    %11 = math.exp %10 : vector<8x8xf32>
    %cst_9 = arith.constant dense<0.000000e+00> : vector<8xf32>
    %12 = vector.multi_reduction <add>, %11, %cst_9 [1] : vector<8x8xf32> to vector<8xf32>
    %13 = vector.shape_cast %12 : vector<8xf32> to vector<8x1xf32>
    %14 = vector.broadcast %13 : vector<8x1xf32> to vector<8x8xf32>
    %15 = arith.divf %11, %14 : vector<8x8xf32>
    %c0_10 = arith.constant 0 : index
    %c0_11 = arith.constant 0 : index
    %c0_12 = arith.constant 0 : index
    %c0_13 = arith.constant 0 : index
    %16 = vector.load %arg4[%c0_10, %c0_11, %c0_12, %c0_13] : memref<1x1x8x128xf32, #tpu.memory_space<vmem>>, vector<1x1x8x128xf32>
    %17 = vector.shape_cast %16 : vector<1x1x8x128xf32> to vector<8x128xf32>
    %cst_14 = arith.constant dense<0.000000e+00> : vector<8x128xf32>
    %18 = tpu.matmul %15, %17, %cst_14 {dimension_numbers = #tpu.dot_dimension_numbers<[1], [0], [0], [1], [0, 0, 1, 1], [], []>} : vector<8x8xf32>, vector<8x128xf32>, vector<8x128xf32> -> vector<8x128xf32>
    %c0_15 = arith.constant 0 : index
    %c0_16 = arith.constant 0 : index
    %c0_17 = arith.constant 0 : index
    %c0_18 = arith.constant 0 : index
    %19 = vector.load %arg5[%c0_15, %c0_16, %c0_17, %c0_18] : memref<1x1x8x128xf32, #tpu.memory_space<vmem>>, vector<1x1x8x128xf32>
    %20 = vector.shape_cast %19 : vector<1x1x8x128xf32> to vector<8x128xf32>
    %21 = vector.shape_cast %18 : vector<8x128xf32> to vector<1x1x8x128xf32>
    tpu.vector_store %arg5[%c0_15, %c0_16, %c0_17, %c0_18], %21 {strides = array<i32>} : memref<1x1x8x128xf32, #tpu.memory_space<vmem>>, vector<1x1x8x128xf32>,
    return
  }
  func.func @transform_0(%arg0: i32, %arg1: i32) -> (i32, i32, i32, i32) {
    %c0_i32 = arith.constant 0 : i32
    %c0_i32_0 = arith.constant 0 : i32
    %c0_i32_1 = arith.constant 0 : i32
    return %arg0, %arg1, %c0_i32, %c0_i32_0 : i32, i32, i32, i32
  }
  func.func @transform_1(%arg0: i32, %arg1: i32) -> (i32, i32, i32, i32) {
    %c0_i32 = arith.constant 0 : i32
    %c0_i32_0 = arith.constant 0 : i32
    %c0_i32_1 = arith.constant 0 : i32
    return %arg0, %arg1, %c0_i32, %c0_i32_0 : i32, i32, i32, i32
  }
  func.func @transform_2(%arg0: i32, %arg1: i32) -> (i32, i32, i32, i32) {
    %c0_i32 = arith.constant 0 : i32
    %c0_i32_0 = arith.constant 0 : i32
    %c0_i32_1 = arith.constant 0 : i32
    return %arg0, %arg1, %c0_i32, %c0_i32_0 : i32, i32, i32, i32
  }
  func.func @transform_3(%arg0: i32, %arg1: i32) -> (i32, i32, i32, i32) {
    %c0_i32 = arith.constant 0 : i32
    %c0_i32_0 = arith.constant 0 : i32
    %c0_i32_1 = arith.constant 0 : i32
    return %arg0, %arg1, %c0_i32, %c0_i32_0 : i32, i32, i32, i32
  }
}

module attributes {stable_mosaic.version = 11 : i64} {
  func.func @_linear_kernel(%arg0: i32, %arg1: memref<16x128xf32, #tpu.memory_space<vmem>>, %arg2: memref<128x128xf32, #tpu.memory_space<vmem>>, %arg3: memref<1x128xf32, #tpu.memory_space<vmem>>, %arg4: memref<16x128xf32, #tpu.memory_space<vmem>>) attributes {dimension_semantics = [#tpu.dimension_semantics<parallel>], iteration_bounds = array<i64: 1>, scalar_prefetch = 0 : i64, scratch_operands = 0 : i64, tpu.core_type = #tpu.core_type<tc>, window_params = [{transform_indices = @transform_0, window_bounds = array<i64: 16, 128>}, {pipeline_mode = #tpu.pipeline_mode<synchronous>, transform_indices = @transform_1, window_bounds = array<i64: 128, 128>}, {pipeline_mode = #tpu.pipeline_mode<synchronous>, transform_indices = @transform_2, window_bounds = array<i64: 1, 128>}, {transform_indices = @transform_3, window_bounds = array<i64: 16, 128>}]} {
    %c0 = arith.constant 0 : index
    %c0_0 = arith.constant 0 : index
    %0 = vector.load %arg1[%c0, %c0_0] : memref<16x128xf32, #tpu.memory_space<vmem>>, vector<16x128xf32>
    %c0_1 = arith.constant 0 : index
    %c0_2 = arith.constant 0 : index
    %1 = vector.load %arg2[%c0_1, %c0_2] : memref<128x128xf32, #tpu.memory_space<vmem>>, vector<128x128xf32>
    %cst = arith.constant dense<0.000000e+00> : vector<16x128xf32>
    %2 = tpu.matmul %0, %1, %cst {dimension_numbers = #tpu.dot_dimension_numbers<[1], [0], [0], [1], [0, 0, 1, 1], [], []>} : vector<16x128xf32>, vector<128x128xf32>, vector<16x128xf32> -> vector<16x128xf32>
    %c0_3 = arith.constant 0 : index
    %c0_4 = arith.constant 0 : index
    %3 = vector.load %arg3[%c0_3, %c0_4] : memref<1x128xf32, #tpu.memory_space<vmem>>, vector<1x128xf32>
    %4 = vector.broadcast %3 : vector<1x128xf32> to vector<16x128xf32>
    %5 = arith.addf %2, %4 : vector<16x128xf32>
    %c0_5 = arith.constant 0 : index
    %c0_6 = arith.constant 0 : index
    %6 = vector.load %arg4[%c0_5, %c0_6] : memref<16x128xf32, #tpu.memory_space<vmem>>, vector<16x128xf32>
    tpu.vector_store %arg4[%c0_5, %c0_6], %5 {strides = array<i32>} : memref<16x128xf32, #tpu.memory_space<vmem>>, vector<16x128xf32>,
    return
  }
  func.func @transform_0(%arg0: i32) -> (i32, i32) {
    %c0_i32 = arith.constant 0 : i32
    %c0_i32_0 = arith.constant 0 : i32
    return %arg0, %c0_i32 : i32, i32
  }
  func.func @transform_1(%arg0: i32) -> (i32, i32) {
    %c0_i32 = arith.constant 0 : i32
    %c0_i32_0 = arith.constant 0 : i32
    %c0_i32_1 = arith.constant 0 : i32
    return %c0_i32, %c0_i32_0 : i32, i32
  }
  func.func @transform_2(%arg0: i32) -> (i32, i32) {
    %c0_i32 = arith.constant 0 : i32
    %c0_i32_0 = arith.constant 0 : i32
    %c0_i32_1 = arith.constant 0 : i32
    return %c0_i32, %c0_i32_0 : i32, i32
  }
  func.func @transform_3(%arg0: i32) -> (i32, i32) {
    %c0_i32 = arith.constant 0 : i32
    %c0_i32_0 = arith.constant 0 : i32
    return %arg0, %c0_i32 : i32, i32
  }
}

</mosaic_0001>

<llo_original>
// kernel: attention_pallas.3
$region0: #{attention_pallas.3}
  #allocation0 [shape = 'u32[]', space=smem, size = 0x4, offset = 0x4, fixed_abs, tag = 'smem constant byte address 0x4 - core index']
  #allocation1 [shape = 'u32[144,128]{1,0:T(1,128)}', space=vmem, size = 0x12000, scoped, tag = 'internal scratch']
  %s0 = inlined_call_operand.vmem [shape: f32[16,128], index: 0, kind: input, shape index: {}]
  %s1 = inlined_call_operand.vmem [shape: f32[128,256], index: 1, kind: input, shape index: {}]
  %s2 = inlined_call_operand.vmem [shape: f32[1,256], index: 2, kind: input, shape index: {}]
  %s3 = inlined_call_operand.vmem [shape: f32[16,256], index: 3, kind: output, shape index: {}]
  %s4 = sld [smem:[#allocation0]]
  $region22: #{attention_pallas.3} parent=0
    _
  %s6 = ssub.s32 1, %s4
  %s7 = scalar_select 0, %s6, %s4
  // Predicated region
  $region2: #{attention_pallas.3} parent=0 // pred_check
    _
  $region3: #{attention_pallas.3} parent=0 // pred_check_branch
    %9 = sbr.rel (0) target = $region5
  $region4: #{attention_pallas.3} parent=0 // pred_region
    _
  $region5: #{attention_pallas.3} parent=0 // pred_fallthru
    _
  // Predicated region
  $region6: #{attention_pallas.3} parent=0 // pred_check
    _
  $region7: #{attention_pallas.3} parent=0 // pred_check_branch
    %11 = sbr.rel (0) target = $region9
  $region8: #{attention_pallas.3} parent=0 // pred_region
    _
  $region9: #{attention_pallas.3} parent=0 // pred_fallthru
    _
  // Predicated region
  $region10: #{attention_pallas.3} parent=0 // pred_check
    _
  $region11: #{attention_pallas.3} parent=0 // pred_check_branch
    %13 = sbr.rel (0) target = $region13
  $region12: #{attention_pallas.3} parent=0 // pred_region
    _
  $region13: #{attention_pallas.3} parent=0 // pred_fallthru
    _
  %v14 = vld [vmem:[%s0] sm:$0xff]
  %v15 = vld [vmem:[%s0 + $0x8] sm:$0xff]
  %v16 = vld [vmem:[%s1] sm:$0xff]
  %v17 = vld [vmem:[%s1 + $0x8] sm:$0xff]
  %v18 = vld [vmem:[%s1 + $0x10] sm:$0xff]
  %v19 = vld [vmem:[%s1 + $0x18] sm:$0xff]
  %v20 = vld [vmem:[%s1 + $0x20] sm:$0xff]
  %v21 = vld [vmem:[%s1 + $0x28] sm:$0xff]
  %v22 = vld [vmem:[%s1 + $0x30] sm:$0xff]
  %v23 = vld [vmem:[%s1 + $0x38] sm:$0xff]
  %v24 = vld [vmem:[%s1 + $0x40] sm:$0xff]
  %v25 = vld [vmem:[%s1 + $0x48] sm:$0xff]
  %v26 = vld [vmem:[%s1 + $0x50] sm:$0xff]
  %v27 = vld [vmem:[%s1 + $0x58] sm:$0xff]
  %v28 = vld [vmem:[%s1 + $0x60] sm:$0xff]
  %v29 = vld [vmem:[%s1 + $0x68] sm:$0xff]
  %v30 = vld [vmem:[%s1 + $0x70] sm:$0xff]
  %v31 = vld [vmem:[%s1 + $0x78] sm:$0xff]
  %v32 = vld [vmem:[%s1 + $0x80] sm:$0xff]
  %v33 = vld [vmem:[%s1 + $0x88] sm:$0xff]
  %v34 = vld [vmem:[%s1 + $0x90] sm:$0xff]
  %v35 = vld [vmem:[%s1 + $0x98] sm:$0xff]
  %v36 = vld [vmem:[%s1 + $0xa0] sm:$0xff]
  %v37 = vld [vmem:[%s1 + $0xa8] sm:$0xff]
  %v38 = vld [vmem:[%s1 + $0xb0] sm:$0xff]
  %v39 = vld [vmem:[%s1 + $0xb8] sm:$0xff]
  %v40 = vld [vmem:[%s1 + $0xc0] sm:$0xff]
  %v41 = vld [vmem:[%s1 + $0xc8] sm:$0xff]
  %v42 = vld [vmem:[%s1 + $0xd0] sm:$0xff]
  %v43 = vld [vmem:[%s1 + $0xd8] sm:$0xff]
  %v44 = vld [vmem:[%s1 + $0xe0] sm:$0xff]
  %v45 = vld [vmem:[%s1 + $0xe8] sm:$0xff]
  %v46 = vld [vmem:[%s1 + $0xf0] sm:$0xff]
  %v47 = vld [vmem:[%s1 + $0xf8] sm:$0xff]
  %v48 = vld [vmem:[%s2] sm:$0x3]
  %v50 = vlaneseq
  %v51 = vshrl.u32 %v50, 7
  %v52 = vsub.s32 0, %v51
  %v53 = vrot.slane %v48, %v52
  %v54 = vlaneseq
  %v55 = vshrl.u32 %v54, 7
  %v56 = vsub.s32 1, %v55
  %v57 = vrot.slane %v48, %v56
  %60 = vmatprep.subr.mxu0 %v17
  %61 = vmatpush1.msra.mxu0 %v16
  %62 = vmatprep.subr.mxu0 %v19
  %63 = vmatpush1.msra.mxu0 %v18
  %64 = vmatprep.subr.mxu0 %v21
  %65 = vmatpush1.msra.mxu0 %v20
  %66 = vmatprep.subr.mxu0 %v23
  %67 = vmatpush1.msra.mxu0 %v22
  %68 = vmatprep.subr.mxu0 %v25
  %69 = vmatpush1.msra.mxu0 %v24
  %70 = vmatprep.subr.mxu0 %v27
  %71 = vmatpush1.msra.mxu0 %v26
  %72 = vmatprep.subr.mxu0 %v29
  %73 = vmatpush1.msra.mxu0 %v28
  %74 = vmatprep.subr.mxu0 %v31
  %75 = vmatpush1.msra.mxu0 %v30
  %76 = vmatprep.subr.mxu0 %v33
  %77 = vmatpush1.msra.mxu0 %v32
  %78 = vmatprep.subr.mxu0 %v35
  %79 = vmatpush1.msra.mxu0 %v34
  %80 = vmatprep.subr.mxu0 %v37
  %81 = vmatpush1.msra.mxu0 %v36
  %82 = vmatprep.subr.mxu0 %v39
  %83 = vmatpush1.msra.mxu0 %v38
  %84 = vmatprep.subr.mxu0 %v41
  %85 = vmatpush1.msra.mxu0 %v40
  %86 = vmatprep.subr.mxu0 %v43
  %87 = vmatpush1.msra.mxu0 %v42
  %88 = vmatprep.subr.mxu0 %v45
  %89 = vmatpush1.msra.mxu0 %v44
  %90 = vmatprep.subr.mxu0 %v47
  %91 = vmatpush1.msra.mxu0 %v46
  %92 = vmatprep.subr.mxu0 0.0
  %93 = vmatpush1.msra.mxu0 0.0
  %94 = vmatprep.subr.mxu0 0.0
  %95 = vmatpush1.msra.mxu0 0.0
  %96 = vmatprep.subr.mxu0 0.0
  %97 = vmatpush1.msra.mxu0 0.0
  %98 = vmatprep.subr.mxu0 0.0
  %99 = vmatpush1.msra.mxu0 0.0
  %100 = vmatprep.subr.mxu0 0.0
  %101 = vmatpush1.msra.mxu0 0.0
  %102 = vmatprep.subr.mxu0 0.0
  %103 = vmatpush1.msra.mxu0 0.0
  %104 = vmatprep.subr.mxu0 0.0
  %105 = vmatpush1.msra.mxu0 0.0
  %106 = vmatprep.subr.mxu0 0.0
  %107 = vmatpush1.msra.mxu0 0.0
  %108 = vmatprep.subr.mxu0 0.0
  %109 = vmatpush1.msra.mxu0 0.0
  %110 = vmatprep.subr.mxu0 0.0
  %111 = vmatpush1.msra.mxu0 0.0
  %112 = vmatprep.subr.mxu0 0.0
  %113 = vmatpush1.msra.mxu0 0.0
  %114 = vmatprep.subr.mxu0 0.0
  %115 = vmatpush1.msra.mxu0 0.0
  %116 = vmatprep.subr.mxu0 0.0
  %117 = vmatpush1.msra.mxu0 0.0
  %118 = vmatprep.subr.mxu0 0.0
  %119 = vmatpush1.msra.mxu0 0.0
  %120 = vmatprep.subr.mxu0 0.0
  %121 = vmatpush1.msra.mxu0 0.0
  %122 = vmatprep.subr.mxu0 0.0
  %123 = vmatpush1.msra.mxu0 0.0
  %124 = vmatprep.mubr.f32.mxu0 0.0
  %125 = vmatmul.mubr.f32.gmra.mrb[0].mxu0 %v14
  %v126 = vpop.f32.mrb[0].mxu0
  %v127 = vadd.f32 %v53, %v126
  %v128 = vpop.f32.mrb[0].mxu0
  %v129 = vadd.f32 %v57, %v128
  %130 = vmatprep.mubr.f32.mxu0 0.0
  %131 = vmatmul.mubr.f32.gmra.mrb[0].mxu0 %v15
  %v132 = vpop.f32.mrb[0].mxu0
  %v133 = vadd.f32 %v53, %v132
  %v134 = vpop.f32.mrb[0].mxu0
  %v135 = vadd.f32 %v57, %v134
  %136 = vdwg.mxu0
  %137 = vst [vmem:[%s3] sm:$0xff] %v127
  %138 = vst [vmem:[%s3 + $0x8] sm:$0xff] %v129
  %139 = vst [vmem:[%s3 + $0x10] sm:$0xff] %v133
  %140 = vst [vmem:[%s3 + $0x18] sm:$0xff] %v135
  // Predicated region
  $region14: #{attention_pallas.3} parent=0 // pred_check
    _
  $region15: #{attention_pallas.3} parent=0 // pred_check_branch
    %142 = sbr.rel (0) target = $region17
  $region16: #{attention_pallas.3} parent=0 // pred_region
    _
  $region17: #{attention_pallas.3} parent=0 // pred_fallthru
    _
  // Predicated region
  $region18: #{attention_pallas.3} parent=0 // pred_check
    _
  $region19: #{attention_pallas.3} parent=0 // pred_check_branch
    %144 = sbr.rel (0) target = $region21
  $region20: #{attention_pallas.3} parent=0 // pred_region
    _
  $region21: #{attention_pallas.3} parent=0 // pred_fallthru
    _

// kernel: attention_pallas.4
$region0: #{attention_pallas.4}
  #allocation0 [shape = 'u32[]', space=smem, size = 0x4, offset = 0x4, fixed_abs, tag = 'smem constant byte address 0x4 - core index']
  #allocation1 [shape = 'u32[144,128]{1,0:T(1,128)}', space=vmem, size = 0x12000, scoped, tag = 'internal scratch']
  %s0 = inlined_call_operand.vmem [shape: f32[2,8,8,128], index: 0, kind: input, shape index: {}]
  %s1 = inlined_call_operand.vmem [shape: f32[2,8,8,128], index: 1, kind: input, shape index: {}]
  %s2 = inlined_call_operand.vmem [shape: f32[2,8,8,128], index: 2, kind: input, shape index: {}]
  %s3 = inlined_call_operand.vmem [shape: f32[2,8,8,128], index: 3, kind: output, shape index: {}]
  %s4 = sld [smem:[#allocation0]]
  $region45: #{attention_pallas.4} parent=0
    _
  %s6 = ssub.s32 1, %s4
  %s7 = scalar_select 0, %s6, %s4
  loop: start=0, step=1, limit=18
  $region2: #{attention_pallas.4} parent=0 // loop_pre_header
    _
  $region3: #{attention_pallas.4} parent=0 // loop_header
    %s9 = sphi 0, %s13
    %p10 = scmp.ge.s32.totalorder %s9, 18
    %s16 = sphi 0, %s28
    %s17 = sphi 0, %s24
    %s18 = sphi 0, %s16
    %s19 = sphi 0, %s17
    %s20 = sphi 0, %s18
    %s21 = sphi 0, %s19
    %s33 = sphi 0, %s35
    %s36 = sphi 0, %s33
    %s37 = sphi 0, %s36
    %s53 = sphi 0, %s37
    %s61 = sphi 0, %s63
    %s64 = sphi 0, %s61
    %s65 = sphi 0, %s64
    %s81 = sphi 0, %s65
    %s89 = sphi 0, %s91
    %s92 = sphi 0, %s89
    %s93 = sphi 0, %s92
    %s109 = sphi 0, %s93
    %s117 = sphi 0, %s119
    %s120 = sphi 0, %s117
    %s121 = sphi 0, %s120
    %s137 = sphi 0, %s121
  $region4: #{attention_pallas.4} parent=0 // loop_header_branch
    %12 = sbr.rel (%p10) target = $region8
  $region5: #{attention_pallas.4} parent=0 // loop_body
    %s14 = ssub.s32 %s9, 1
    %s15 = ssub.s32 %s9, 2
    %s22 = sadd.s32 1, %s17
    %p23 = scmp.ge.s32.totalorder %s22, 8
    %s24 = scalar_select %p23, 0, %s22
    %s25 = sadd.s32 1, %s16
    %s26 = scalar_select %p23, %s25, %s16
    %p27 = scmp.ge.s32.totalorder %s26, 2
    %s28 = scalar_select %p27, 0, %s26
    %s29 = ssub.s32 %s16, %s28
    %s30 = ssub.s32 %s17, %s24
    %s31 = sor.u32 %s29, %s30
    %p32 = scmp.eq.s32.totalorder %s31, 0
    %s34 = sadd.s32 %s33, 1
    %s35 = scalar_select %p32, %s33, %s34
    %p38 = pneg %p32
    %p39 = scmp.eq.s32.totalorder %s9, 15
    %p40 = por %p38, %p39
    %p41 = scmp.ne.s32.totalorder %s33, %s36
    %p42 = scmp.eq.s32.totalorder %s9, 0
    %p43 = por %p41, %p42
    %p44 = scmp.ne.s32.totalorder %s33, %s36
    %p45 = scmp.eq.s32.totalorder %s14, 15
    %p46 = por %p44, %p45
    %p47 = scmp.ne.s32.totalorder %s36, %s37
    %p48 = scmp.eq.s32.totalorder %s14, 0
    %p49 = por %p47, %p48
    %p50 = scmp.ne.s32.totalorder %s36, %s37
    %p51 = scmp.eq.s32.totalorder %s15, 15
    %p52 = por %p50, %p51
    %p54 = scmp.ne.s32.totalorder %s37, %s53
    %p55 = scmp.eq.s32.totalorder %s15, 0
    %p56 = por %p54, %p55
    %s57 = ssub.s32 %s16, %s28
    %s58 = ssub.s32 %s17, %s24
    %s59 = sor.u32 %s57, %s58
    %p60 = scmp.eq.s32.totalorder %s59, 0
    %s62 = sadd.s32 %s61, 1
    %s63 = scalar_select %p60, %s61, %s62
    %p66 = pneg %p60
    %p67 = scmp.eq.s32.totalorder %s9, 15
    %p68 = por %p66, %p67
    %p69 = scmp.ne.s32.totalorder %s61, %s64
    %p70 = scmp.eq.s32.totalorder %s9, 0
    %p71 = por %p69, %p70
    %p72 = scmp.ne.s32.totalorder %s61, %s64
    %p73 = scmp.eq.s32.totalorder %s14, 15
    %p74 = por %p72, %p73
    %p75 = scmp.ne.s32.totalorder %s64, %s65
    %p76 = scmp.eq.s32.totalorder %s14, 0
    %p77 = por %p75, %p76
    %p78 = scmp.ne.s32.totalorder %s64, %s65
    %p79 = scmp.eq.s32.totalorder %s15, 15
    %p80 = por %p78, %p79
    %p82 = scmp.ne.s32.totalorder %s65, %s81
    %p83 = scmp.eq.s32.totalorder %s15, 0
    %p84 = por %p82, %p83
    %s85 = ssub.s32 %s16, %s28
    %s86 = ssub.s32 %s17, %s24
    %s87 = sor.u32 %s85, %s86
    %p88 = scmp.eq.s32.totalorder %s87, 0
    %s90 = sadd.s32 %s89, 1
    %s91 = scalar_select %p88, %s89, %s90
    %p94 = pneg %p88
    %p95 = scmp.eq.s32.totalorder %s9, 15
    %p96 = por %p94, %p95
    %p97 = scmp.ne.s32.totalorder %s89, %s92
    %p98 = scmp.eq.s32.totalorder %s9, 0
    %p99 = por %p97, %p98
    %p100 = scmp.ne.s32.totalorder %s89, %s92
    %p101 = scmp.eq.s32.totalorder %s14, 15
    %p102 = por %p100, %p101
    %p103 = scmp.ne.s32.totalorder %s92, %s93
    %p104 = scmp.eq.s32.totalorder %s14, 0
    %p105 = por %p103, %p104
    %p106 = scmp.ne.s32.totalorder %s92, %s93
    %p107 = scmp.eq.s32.totalorder %s15, 15
    %p108 = por %p106, %p107
    %p110 = scmp.ne.s32.totalorder %s93, %s109
    %p111 = scmp.eq.s32.totalorder %s15, 0
    %p112 = por %p110, %p111
    %s113 = ssub.s32 %s16, %s28
    %s114 = ssub.s32 %s17, %s24
    %s115 = sor.u32 %s113, %s114
    %p116 = scmp.eq.s32.totalorder %s115, 0
    %s118 = sadd.s32 %s117, 1
    %s119 = scalar_select %p116, %s117, %s118
    %p122 = pneg %p116
    %p123 = scmp.eq.s32.totalorder %s9, 15
    %p124 = por %p122, %p123
    %p125 = scmp.ne.s32.totalorder %s117, %s120
    %p126 = scmp.eq.s32.totalorder %s9, 0
    %p127 = por %p125, %p126
    %p128 = scmp.ne.s32.totalorder %s117, %s120
    %p129 = scmp.eq.s32.totalorder %s14, 15
    %p130 = por %p128, %p129
    %p131 = scmp.ne.s32.totalorder %s120, %s121
    %p132 = scmp.eq.s32.totalorder %s14, 0
    %p133 = por %p131, %p132
    %p134 = scmp.ne.s32.totalorder %s120, %s121
    %p135 = scmp.eq.s32.totalorder %s15, 15
    %p136 = por %p134, %p135
    %p138 = scmp.ne.s32.totalorder %s121, %s137
    %p139 = scmp.eq.s32.totalorder %s15, 0
    %p140 = por %p138, %p139
    %p141 = scmp.le.s32.totalorder 1, %s9
    %p142 = scmp.lt.s32.totalorder %s9, 17
    %p143 = pnand %p141, %p142
    %p144 = pneg %p143
    // Predicated region
    $region9: #{attention_pallas.4} parent=5 // pred_check
      _
    $region10: #{attention_pallas.4} parent=5 // pred_check_branch
      %146 = sbr.rel (%p143) target = $region12
    $region11: #{attention_pallas.4} parent=5 // pred_region
      %s147 = ssub.s32 %s9, 1
    $region12: #{attention_pallas.4} parent=5 // pred_fallthru
      _
    %p148 = scmp.lt.s32.totalorder %s9, 16
    // Predicated region
    $region13: #{attention_pallas.4} parent=5 // pred_check
      %p149 = pneg %p148
    $region14: #{attention_pallas.4} parent=5 // pred_check_branch
      %151 = sbr.rel (%p149) target = $region16
    $region15: #{attention_pallas.4} parent=5 // pred_region
      // Predicated region
      $region17: #{attention_pallas.4} parent=15 // pred_check
        %p152 = pneg %p43
      $region18: #{attention_pallas.4} parent=15 // pred_check_branch
        %154 = sbr.rel (%p152) target = $region20
      $region19: #{attention_pallas.4} parent=15 // pred_region
        %p155 = scmp.lt.s32.totalorder %s16, 1
        %s156 = scalar_select %p155, %s16, 1
        %p157 = scmp.lt.s32.totalorder %s17, 7
        %s158 = scalar_select %p157, %s17, 7
        %s159 = smul.addr %s156, 8
        %s160 = sadd.s32 %s158, %s159
        %s161 = smul.addr %s160, 8
        %s162 = scalar_lea.vmem %s0, %s161
      $region20: #{attention_pallas.4} parent=15 // pred_fallthru
        _
      // Predicated region
      $region21: #{attention_pallas.4} parent=15 // pred_check
        %p163 = pneg %p71
      $region22: #{attention_pallas.4} parent=15 // pred_check_branch
        %165 = sbr.rel (%p163) target = $region24
      $region23: #{attention_pallas.4} parent=15 // pred_region
        %p166 = scmp.lt.s32.totalorder %s16, 1
        %s167 = scalar_select %p166, %s16, 1
        %p168 = scmp.lt.s32.totalorder %s17, 7
        %s169 = scalar_select %p168, %s17, 7
        %s170 = smul.addr %s167, 8
        %s171 = sadd.s32 %s169, %s170
        %s172 = smul.addr %s171, 8
        %s173 = scalar_lea.vmem %s1, %s172
      $region24: #{attention_pallas.4} parent=15 // pred_fallthru
        _
      // Predicated region
      $region25: #{attention_pallas.4} parent=15 // pred_check
        %p174 = pneg %p99
      $region26: #{attention_pallas.4} parent=15 // pred_check_branch
        %176 = sbr.rel (%p174) target = $region28
      $region27: #{attention_pallas.4} parent=15 // pred_region
        %p177 = scmp.lt.s32.totalorder %s16, 1
        %s178 = scalar_select %p177, %s16, 1
        %p179 = scmp.lt.s32.totalorder %s17, 7
        %s180 = scalar_select %p179, %s17, 7
        %s181 = smul.addr %s178, 8
        %s182 = sadd.s32 %s180, %s181
        %s183 = smul.addr %s182, 8
        %s184 = scalar_lea.vmem %s2, %s183
      $region28: #{attention_pallas.4} parent=15 // pred_fallthru
        _
    $region16: #{attention_pallas.4} parent=5 // pred_fallthru
      _
    %p185 = scmp.le.s32.totalorder 1, %s9
    %p186 = scmp.lt.s32.totalorder %s9, 17
    %p187 = pnand %p185, %p186
    %p188 = pneg %p187
    // Predicated region
    $region29: #{attention_pallas.4} parent=5 // pred_check
      _
    $region30: #{attention_pallas.4} parent=5 // pred_check_branch
      %190 = sbr.rel (%p187) target = $region32
    $region31: #{attention_pallas.4} parent=5 // pred_region
      %s191 = ssub.s32 %s9, 1
      %p192 = scmp.lt.s32.totalorder %s18, 1
      %s193 = scalar_select %p192, %s18, 1
      %p194 = scmp.lt.s32.totalorder %s19, 7
      %s195 = scalar_select %p194, %s19, 7
      %s196 = smul.addr %s193, 8
      %s197 = sadd.s32 %s195, %s196
      %s198 = smul.addr %s197, 8
      %s199 = scalar_lea.vmem %s0, %s198
      %p200 = pneg %p49
      %p201 = pneg %p46
      %p202 = scmp.lt.s32.totalorder %s18, 1
      %s203 = scalar_select %p202, %s18, 1
      %p204 = scmp.lt.s32.totalorder %s19, 7
      %s205 = scalar_select %p204, %s19, 7
      %s206 = smul.addr %s203, 8
      %s207 = sadd.s32 %s205, %s206
      %s208 = smul.addr %s207, 8
      %s209 = scalar_lea.vmem %s1, %s208
      %p210 = pneg %p77
      %p211 = pneg %p74
      %p212 = scmp.lt.s32.totalorder %s18, 1
      %s213 = scalar_select %p212, %s18, 1
      %p214 = scmp.lt.s32.totalorder %s19, 7
      %s215 = scalar_select %p214, %s19, 7
      %s216 = smul.addr %s213, 8
      %s217 = sadd.s32 %s215, %s216
      %s218 = smul.addr %s217, 8
      %s219 = scalar_lea.vmem %s2, %s218
      %p220 = pneg %p105
      %p221 = pneg %p102
      %p222 = pneg %p133
      %p223 = pneg %p130
      %p224 = scmp.lt.s32.totalorder %s18, 1
      %s225 = scalar_select %p224, %s18, 1
      %p226 = scmp.lt.s32.totalorder %s19, 7
      %s227 = scalar_select %p226, %s19, 7
      %s228 = smul.addr %s225, 8
      %s229 = sadd.s32 %s227, %s228
      %s230 = smul.addr %s229, 8
      %s231 = scalar_lea.vmem %s3, %s230
      %p232 = scmp.lt.s32.totalorder %s18, 1
      %s233 = scalar_select %p232, %s18, 1
      %p234 = scmp.lt.s32.totalorder %s19, 7
      %s235 = scalar_select %p234, %s19, 7
      %s236 = smul.addr %s233, 8
      %s237 = sadd.s32 %s235, %s236
      %s238 = smul.addr %s237, 8
      %s239 = scalar_lea.vmem %s0, %s238
      %p240 = scmp.lt.s32.totalorder %s18, 1
      %s241 = scalar_select %p240, %s18, 1
      %p242 = scmp.lt.s32.totalorder %s19, 7
      %s243 = scalar_select %p242, %s19, 7
      %s244 = smul.addr %s241, 8
      %s245 = sadd.s32 %s243, %s244
      %s246 = smul.addr %s245, 8
      %s247 = scalar_lea.vmem %s1, %s246
      %p248 = scmp.lt.s32.totalorder %s18, 1
      %s249 = scalar_select %p248, %s18, 1
      %p250 = scmp.lt.s32.totalorder %s19, 7
      %s251 = scalar_select %p250, %s19, 7
      %s252 = smul.addr %s249, 8
      %s253 = sadd.s32 %s251, %s252
      %s254 = smul.addr %s253, 8
      %s255 = scalar_lea.vmem %s2, %s254
      %p256 = scmp.lt.s32.totalorder %s18, 1
      %s257 = scalar_select %p256, %s18, 1
      %p258 = scmp.lt.s32.totalorder %s19, 7
      %s259 = scalar_select %p258, %s19, 7
      %s260 = smul.addr %s257, 8
      %s261 = sadd.s32 %s259, %s260
      %s262 = smul.addr %s261, 8
      %s263 = scalar_lea.vmem %s3, %s262
      %v264 = vld [vmem:[%s239] sm:$0xff]
      %v265 = vld [vmem:[%s247] sm:$0xff]
      %266 = vmatprep.subr.mxu0 0.0
      %267 = vmatpush1.xpose.msra.mxu0 %v265
      %268 = vmatprep.subr.mxu0 0.0
      %269 = vmatpush1.xpose.msra.mxu0 0.0
      %270 = vmatprep.subr.mxu0 0.0
      %271 = vmatpush1.xpose.msra.mxu0 0.0
      %272 = vmatprep.subr.mxu0 0.0
      %273 = vmatpush1.xpose.msra.mxu0 0.0
      %274 = vmatprep.subr.mxu0 0.0
      %275 = vmatpush1.xpose.msra.mxu0 0.0
      %276 = vmatprep.subr.mxu0 0.0
      %277 = vmatpush1.xpose.msra.mxu0 0.0
      %278 = vmatprep.subr.mxu0 0.0
      %279 = vmatpush1.xpose.msra.mxu0 0.0
      %280 = vmatprep.subr.mxu0 0.0
      %281 = vmatpush1.xpose.msra.mxu0 0.0
      %282 = vmatprep.subr.mxu0 0.0
      %283 = vmatpush1.xpose.msra.mxu0 0.0
      %284 = vmatprep.subr.mxu0 0.0
      %285 = vmatpush1.xpose.msra.mxu0 0.0
      %286 = vmatprep.subr.mxu0 0.0
      %287 = vmatpush1.xpose.msra.mxu0 0.0
      %288 = vmatprep.subr.mxu0 0.0
      %289 = vmatpush1.xpose.msra.mxu0 0.0
      %290 = vmatprep.subr.mxu0 0.0
      %291 = vmatpush1.xpose.msra.mxu0 0.0
      %292 = vmatprep.subr.mxu0 0.0
      %293 = vmatpush1.xpose.msra.mxu0 0.0
      %294 = vmatprep.subr.mxu0 0.0
      %295 = vmatpush1.xpose.msra.mxu0 0.0
      %296 = vmatprep.subr.mxu0 0.0
      %297 = vmatpush1.xpose.msra.mxu0 0.0
      %298 = vmatprep.subr.mxu0 0.0
      %299 = vmatpush1.xpose.msra.mxu0 0.0
      %300 = vmatprep.subr.mxu0 0.0
      %301 = vmatpush1.xpose.msra.mxu0 0.0
      %302 = vmatprep.subr.mxu0 0.0
      %303 = vmatpush1.xpose.msra.mxu0 0.0
      %304 = vmatprep.subr.mxu0 0.0
      %305 = vmatpush1.xpose.msra.mxu0 0.0
      %306 = vmatprep.subr.mxu0 0.0
      %307 = vmatpush1.xpose.msra.mxu0 0.0
      %308 = vmatprep.subr.mxu0 0.0
      %309 = vmatpush1.xpose.msra.mxu0 0.0
      %310 = vmatprep.subr.mxu0 0.0
      %311 = vmatpush1.xpose.msra.mxu0 0.0
      %312 = vmatprep.subr.mxu0 0.0
      %313 = vmatpush1.xpose.msra.mxu0 0.0
      %314 = vmatprep.subr.mxu0 0.0
      %315 = vmatpush1.xpose.msra.mxu0 0.0
      %316 = vmatprep.subr.mxu0 0.0
      %317 = vmatpush1.xpose.msra.mxu0 0.0
      %318 = vmatprep.subr.mxu0 0.0
      %319 = vmatpush1.xpose.msra.mxu0 0.0
      %320 = vmatprep.subr.mxu0 0.0
      %321 = vmatpush1.xpose.msra.mxu0 0.0
      %322 = vmatprep.subr.mxu0 0.0
      %323 = vmatpush1.xpose.msra.mxu0 0.0
      %324 = vmatprep.subr.mxu0 0.0
      %325 = vmatpush1.xpose.msra.mxu0 0.0
      %326 = vmatprep.subr.mxu0 0.0
      %327 = vmatpush1.xpose.msra.mxu0 0.0
      %328 = vmatprep.subr.mxu0 0.0
      %329 = vmatpush1.xpose.msra.mxu0 0.0
      %330 = vmatprep.mubr.f32.mxu0 0.0
      %331 = vmatmul.mubr.f32.gmra.mrb[0].mxu0 %v264
      %v332 = vpop.f32.mrb[0].mxu0
      %v333 = vadd.f32 0.0, %v332
      %v334 = vpop.f32.mrb[0].mxu0
      %335 = vdwg.mxu0
      %v336 = vmul.f32 %v333, 0.35355338
      %vm337 = vcmask 64512
      %v338 = vsel %vm337, %v336, -inf
      %339 = vmax.xlane.f32.xlu0 %v338
      %v340 = vpop.xlane.xlu0 %339
      %v341 = vsub.f32 %v336, %v340
      %v342 = vmul.f32 %v341, 1.442695
      %v343 = vpow.pop %v342
      %v344 = vsel %vm337, %v343, 0.0
      %345 = vadd.xlane.f32.xlu0 %v344
      %v346 = vpop.xlane.xlu0 %345
      %v347 = vrcp.pop %v346
      %v348 = vmul.f32 %v343, %v347
      %v349 = vld [vmem:[%s255] sm:$0xff]
      %v351 = vsel %vm337, %v348, 0
      %353 = vmatprep.subr.mxu0 0.0
      %354 = vmatpush1.msra.mxu0 %v349
      %355 = vmatprep.subr.mxu0 0.0
      %356 = vmatpush1.msra.mxu0 0.0
      %357 = vmatprep.subr.mxu0 0.0
      %358 = vmatpush1.msra.mxu0 0.0
      %359 = vmatprep.subr.mxu0 0.0
      %360 = vmatpush1.msra.mxu0 0.0
      %361 = vmatprep.subr.mxu0 0.0
      %362 = vmatpush1.msra.mxu0 0.0
      %363 = vmatprep.subr.mxu0 0.0
      %364 = vmatpush1.msra.mxu0 0.0
      %365 = vmatprep.subr.mxu0 0.0
      %366 = vmatpush1.msra.mxu0 0.0
      %367 = vmatprep.subr.mxu0 0.0
      %368 = vmatpush1.msra.mxu0 0.0
      %369 = vmatprep.subr.mxu0 0.0
      %370 = vmatpush1.msra.mxu0 0.0
      %371 = vmatprep.subr.mxu0 0.0
      %372 = vmatpush1.msra.mxu0 0.0
      %373 = vmatprep.subr.mxu0 0.0
      %374 = vmatpush1.msra.mxu0 0.0
      %375 = vmatprep.subr.mxu0 0.0
      %376 = vmatpush1.msra.mxu0 0.0
      %377 = vmatprep.subr.mxu0 0.0
      %378 = vmatpush1.msra.mxu0 0.0
      %379 = vmatprep.subr.mxu0 0.0
      %380 = vmatpush1.msra.mxu0 0.0
      %381 = vmatprep.subr.mxu0 0.0
      %382 = vmatpush1.msra.mxu0 0.0
      %383 = vmatprep.subr.mxu0 0.0
      %384 = vmatpush1.msra.mxu0 0.0
      %385 = vmatprep.subr.mxu0 0.0
      %386 = vmatpush1.msra.mxu0 0.0
      %387 = vmatprep.subr.mxu0 0.0
      %388 = vmatpush1.msra.mxu0 0.0
      %389 = vmatprep.subr.mxu0 0.0
      %390 = vmatpush1.msra.mxu0 0.0
      %391 = vmatprep.subr.mxu0 0.0
      %392 = vmatpush1.msra.mxu0 0.0
      %393 = vmatprep.subr.mxu0 0.0
      %394 = vmatpush1.msra.mxu0 0.0
      %395 = vmatprep.subr.mxu0 0.0
      %396 = vmatpush1.msra.mxu0 0.0
      %397 = vmatprep.subr.mxu0 0.0
      %398 = vmatpush1.msra.mxu0 0.0
      %399 = vmatprep.subr.mxu0 0.0
      %400 = vmatpush1.msra.mxu0 0.0
      %401 = vmatprep.subr.mxu0 0.0
      %402 = vmatpush1.msra.mxu0 0.0
      %403 = vmatprep.subr.mxu0 0.0
      %404 = vmatpush1.msra.mxu0 0.0
      %405 = vmatprep.subr.mxu0 0.0
      %406 = vmatpush1.msra.mxu0 0.0
      %407 = vmatprep.subr.mxu0 0.0
      %408 = vmatpush1.msra.mxu0 0.0
      %409 = vmatprep.subr.mxu0 0.0
      %410 = vmatpush1.msra.mxu0 0.0
      %411 = vmatprep.subr.mxu0 0.0
      %412 = vmatpush1.msra.mxu0 0.0
      %413 = vmatprep.subr.mxu0 0.0
      %414 = vmatpush1.msra.mxu0 0.0
      %415 = vmatprep.subr.mxu0 0.0
      %416 = vmatpush1.msra.mxu0 0.0
      %417 = vmatprep.mubr.f32.mxu0 0.0
      %418 = vmatmul.mubr.f32.gmra.mrb[0].mxu0 %v351
      %v419 = vpop.f32.mrb[0].mxu0
      %v420 = vadd.f32 0.0, %v419
      %v421 = vpop.f32.mrb[0].mxu0
      %422 = vdwg.mxu0
      %423 = vst [vmem:[%s263] sm:$0xff] %v420
      %p424 = scmp.lt.s32.totalorder %s18, 1
      %s425 = scalar_select %p424, %s18, 1
      %p426 = scmp.lt.s32.totalorder %s19, 7
      %s427 = scalar_select %p426, %s19, 7
      %s428 = smul.addr %s425, 8
      %s429 = sadd.s32 %s427, %s428
      %s430 = smul.addr %s429, 8
      %s431 = scalar_lea.vmem %s3, %s430
      // Predicated region
      $region33: #{attention_pallas.4} parent=31 // pred_check
        %p432 = pneg %p130
      $region34: #{attention_pallas.4} parent=31 // pred_check_branch
        %434 = sbr.rel (%p432) target = $region36
      $region35: #{attention_pallas.4} parent=31 // pred_region
        _
      $region36: #{attention_pallas.4} parent=31 // pred_fallthru
        _
    $region32: #{attention_pallas.4} parent=5 // pred_fallthru
      _
    %p435 = scmp.le.s32.totalorder 2, %s9
    // Predicated region
    $region37: #{attention_pallas.4} parent=5 // pred_check
      %p436 = pneg %p435
    $region38: #{attention_pallas.4} parent=5 // pred_check_branch
      %438 = sbr.rel (%p436) target = $region40
    $region39: #{attention_pallas.4} parent=5 // pred_region
      %s439 = ssub.s32 %s9, 2
      // Predicated region
      $region41: #{attention_pallas.4} parent=39 // pred_check
        %p440 = pneg %p136
      $region42: #{attention_pallas.4} parent=39 // pred_check_branch
        %442 = sbr.rel (%p440) target = $region44
      $region43: #{attention_pallas.4} parent=39 // pred_region
        %p443 = scmp.lt.s32.totalorder %s20, 1
        %s444 = scalar_select %p443, %s20, 1
        %p445 = scmp.lt.s32.totalorder %s21, 7
        %s446 = scalar_select %p445, %s21, 7
        %s447 = smul.addr %s444, 8
        %s448 = sadd.s32 %s446, %s447
        %s449 = smul.addr %s448, 8
        %s450 = scalar_lea.vmem %s3, %s449
      $region44: #{attention_pallas.4} parent=39 // pred_fallthru
        _
    $region40: #{attention_pallas.4} parent=5 // pred_fallthru
      _
  $region6: #{attention_pallas.4} parent=0 // loop_footer
    %s13 = sadd.s32 1, %s9
  $region7: #{attention_pallas.4} parent=0 // loop_footer_branch
    %8 = sbr.rel target = $region3
  $region8: #{attention_pallas.4} parent=0 // loop_exit
    _

// kernel: attention_pallas.5
$region0: #{attention_pallas.5}
  #allocation0 [shape = 'u32[]', space=smem, size = 0x4, offset = 0x4, fixed_abs, tag = 'smem constant byte address 0x4 - core index']
  #allocation1 [shape = 'u32[144,128]{1,0:T(1,128)}', space=vmem, size = 0x12000, scoped, tag = 'internal scratch']
  %s0 = inlined_call_operand.vmem [shape: f32[16,128], index: 0, kind: input, shape index: {}]
  %s1 = inlined_call_operand.vmem [shape: f32[128,128], index: 1, kind: input, shape index: {}]
  %s2 = inlined_call_operand.vmem [shape: f32[1,128], index: 2, kind: input, shape index: {}]
  %s3 = inlined_call_operand.vmem [shape: f32[16,128], index: 3, kind: output, shape index: {}]
  %s4 = sld [smem:[#allocation0]]
  $region22: #{attention_pallas.5} parent=0
    _
  %s6 = ssub.s32 1, %s4
  %s7 = scalar_select 0, %s6, %s4
  // Predicated region
  $region2: #{attention_pallas.5} parent=0 // pred_check
    _
  $region3: #{attention_pallas.5} parent=0 // pred_check_branch
    %9 = sbr.rel (0) target = $region5
  $region4: #{attention_pallas.5} parent=0 // pred_region
    _
  $region5: #{attention_pallas.5} parent=0 // pred_fallthru
    _
  // Predicated region
  $region6: #{attention_pallas.5} parent=0 // pred_check
    _
  $region7: #{attention_pallas.5} parent=0 // pred_check_branch
    %11 = sbr.rel (0) target = $region9
  $region8: #{attention_pallas.5} parent=0 // pred_region
    _
  $region9: #{attention_pallas.5} parent=0 // pred_fallthru
    _
  // Predicated region
  $region10: #{attention_pallas.5} parent=0 // pred_check
    _
  $region11: #{attention_pallas.5} parent=0 // pred_check_branch
    %13 = sbr.rel (0) target = $region13
  $region12: #{attention_pallas.5} parent=0 // pred_region
    _
  $region13: #{attention_pallas.5} parent=0 // pred_fallthru
    _
  %v14 = vld [vmem:[%s0] sm:$0xff]
  %v15 = vld [vmem:[%s0 + $0x8] sm:$0xff]
  %v16 = vld [vmem:[%s1] sm:$0xff]
  %v17 = vld [vmem:[%s1 + $0x8] sm:$0xff]
  %v18 = vld [vmem:[%s1 + $0x10] sm:$0xff]
  %v19 = vld [vmem:[%s1 + $0x18] sm:$0xff]
  %v20 = vld [vmem:[%s1 + $0x20] sm:$0xff]
  %v21 = vld [vmem:[%s1 + $0x28] sm:$0xff]
  %v22 = vld [vmem:[%s1 + $0x30] sm:$0xff]
  %v23 = vld [vmem:[%s1 + $0x38] sm:$0xff]
  %v24 = vld [vmem:[%s1 + $0x40] sm:$0xff]
  %v25 = vld [vmem:[%s1 + $0x48] sm:$0xff]
  %v26 = vld [vmem:[%s1 + $0x50] sm:$0xff]
  %v27 = vld [vmem:[%s1 + $0x58] sm:$0xff]
  %v28 = vld [vmem:[%s1 + $0x60] sm:$0xff]
  %v29 = vld [vmem:[%s1 + $0x68] sm:$0xff]
  %v30 = vld [vmem:[%s1 + $0x70] sm:$0xff]
  %v31 = vld [vmem:[%s1 + $0x78] sm:$0xff]
  %v32 = vld [vmem:[%s2] sm:$0x1]
  %v34 = vlaneseq
  %v35 = vshrl.u32 %v34, 7
  %v36 = vsub.s32 0, %v35
  %v37 = vrot.slane %v32, %v36
  %39 = vmatprep.subr.mxu0 0.0
  %40 = vmatpush1.msra.mxu0 %v16
  %41 = vmatprep.subr.mxu0 0.0
  %42 = vmatpush1.msra.mxu0 %v17
  %43 = vmatprep.subr.mxu0 0.0
  %44 = vmatpush1.msra.mxu0 %v18
  %45 = vmatprep.subr.mxu0 0.0
  %46 = vmatpush1.msra.mxu0 %v19
  %47 = vmatprep.subr.mxu0 0.0
  %48 = vmatpush1.msra.mxu0 %v20
  %49 = vmatprep.subr.mxu0 0.0
  %50 = vmatpush1.msra.mxu0 %v21
  %51 = vmatprep.subr.mxu0 0.0
  %52 = vmatpush1.msra.mxu0 %v22
  %53 = vmatprep.subr.mxu0 0.0
  %54 = vmatpush1.msra.mxu0 %v23
  %55 = vmatprep.subr.mxu0 0.0
  %56 = vmatpush1.msra.mxu0 %v24
  %57 = vmatprep.subr.mxu0 0.0
  %58 = vmatpush1.msra.mxu0 %v25
  %59 = vmatprep.subr.mxu0 0.0
  %60 = vmatpush1.msra.mxu0 %v26
  %61 = vmatprep.subr.mxu0 0.0
  %62 = vmatpush1.msra.mxu0 %v27
  %63 = vmatprep.subr.mxu0 0.0
  %64 = vmatpush1.msra.mxu0 %v28
  %65 = vmatprep.subr.mxu0 0.0
  %66 = vmatpush1.msra.mxu0 %v29
  %67 = vmatprep.subr.mxu0 0.0
  %68 = vmatpush1.msra.mxu0 %v30
  %69 = vmatprep.subr.mxu0 0.0
  %70 = vmatpush1.msra.mxu0 %v31
  %71 = vmatprep.subr.mxu0 0.0
  %72 = vmatpush1.msra.mxu0 0.0
  %73 = vmatprep.subr.mxu0 0.0
  %74 = vmatpush1.msra.mxu0 0.0
  %75 = vmatprep.subr.mxu0 0.0
  %76 = vmatpush1.msra.mxu0 0.0
  %77 = vmatprep.subr.mxu0 0.0
  %78 = vmatpush1.msra.mxu0 0.0
  %79 = vmatprep.subr.mxu0 0.0
  %80 = vmatpush1.msra.mxu0 0.0
  %81 = vmatprep.subr.mxu0 0.0
  %82 = vmatpush1.msra.mxu0 0.0
  %83 = vmatprep.subr.mxu0 0.0
  %84 = vmatpush1.msra.mxu0 0.0
  %85 = vmatprep.subr.mxu0 0.0
  %86 = vmatpush1.msra.mxu0 0.0
  %87 = vmatprep.subr.mxu0 0.0
  %88 = vmatpush1.msra.mxu0 0.0
  %89 = vmatprep.subr.mxu0 0.0
  %90 = vmatpush1.msra.mxu0 0.0
  %91 = vmatprep.subr.mxu0 0.0
  %92 = vmatpush1.msra.mxu0 0.0
  %93 = vmatprep.subr.mxu0 0.0
  %94 = vmatpush1.msra.mxu0 0.0
  %95 = vmatprep.subr.mxu0 0.0
  %96 = vmatpush1.msra.mxu0 0.0
  %97 = vmatprep.subr.mxu0 0.0
  %98 = vmatpush1.msra.mxu0 0.0
  %99 = vmatprep.subr.mxu0 0.0
  %100 = vmatpush1.msra.mxu0 0.0
  %101 = vmatprep.subr.mxu0 0.0
  %102 = vmatpush1.msra.mxu0 0.0
  %103 = vmatprep.mubr.f32.mxu0 0.0
  %104 = vmatmul.mubr.f32.gmra.mrb[0].mxu0 %v14
  %v105 = vpop.f32.mrb[0].mxu0
  %v106 = vadd.f32 %v37, %v105
  %v107 = vpop.f32.mrb[0].mxu0
  %108 = vmatprep.mubr.f32.mxu0 0.0
  %109 = vmatmul.mubr.f32.gmra.mrb[0].mxu0 %v15
  %v110 = vpop.f32.mrb[0].mxu0
  %v111 = vadd.f32 %v37, %v110
  %v112 = vpop.f32.mrb[0].mxu0
  %113 = vdwg.mxu0
  %114 = vst [vmem:[%s3] sm:$0xff] %v106
  %115 = vst [vmem:[%s3 + $0x8] sm:$0xff] %v111
  // Predicated region
  $region14: #{attention_pallas.5} parent=0 // pred_check
    _
  $region15: #{attention_pallas.5} parent=0 // pred_check_branch
    %117 = sbr.rel (0) target = $region17
  $region16: #{attention_pallas.5} parent=0 // pred_region
    _
  $region17: #{attention_pallas.5} parent=0 // pred_fallthru
    _
  // Predicated region
  $region18: #{attention_pallas.5} parent=0 // pred_check
    _
  $region19: #{attention_pallas.5} parent=0 // pred_check_branch
    %119 = sbr.rel (0) target = $region21
  $region20: #{attention_pallas.5} parent=0 // pred_region
    _
  $region21: #{attention_pallas.5} parent=0 // pred_fallthru
    _

</llo_original>
